<compile_context>
chip_gen: v7x
topology: tpu7x:2x2x1
jax: 0.10.0
libtpu: 0.0.40
codegen_flags: <defaults>
</compile_context>

<pallas_src>
import math

import jax
import jax.numpy as jnp
from jax.experimental import pallas as pl
from jax.experimental.pallas import tpu as pltpu


def _pe_add_kernel(inv_freq_ref, phase_ref, x_ref, o_ref):
    ts = x_ref.shape[0]
    i = pl.program_id(0)

    # Absolute sequence positions for this tile: (ts, 1), f32.
    pos = (i * ts + jax.lax.broadcasted_iota(jnp.int32, (ts, 1), 0)).astype(
        jnp.float32
    )

    # pe[p, c] = sin(pos[p] * inv_freq[c] + phase[c]) where the (1, B*D)
    # factors already carry the batch tiling and the odd-lane pi/2 phase
    # (turning sin into cos). Single transcendental per output element.
    pe = jnp.sin(pos * inv_freq_ref[...] + phase_ref[...])  # (ts, B*D), f32

    # Add in the input dtype (exact for f32; bf16-native VALU on v6e/v7x).
    x = x_ref[...]
    o_ref[...] = x + pe.astype(x.dtype)


def _pick_tile(S, row_bytes, itemsize, target_bytes=8 << 20):
    """Fixed, alignment-friendly tile over the sequence axis.

    Tiles are multiples of 8 (f32) / 16 (sub-32-bit) sublanes unless the block
    covers the full sequence (full-extent blocks are always legal). Uses a
    cdiv grid, so S need not be divisible by the tile.
    """
    align = 16 if itemsize < 4 else 8
    max_rows = max(1, target_bytes // max(row_bytes, 1))
    if S <= max_rows:
        # Whole array fits in one target-sized block. Prefer a 2-step grid
        # (megacore-shardable on v7x) when the sequence is long enough.
        if S >= 2 * align:
            half = -(-S // 2)                  # ceil(S / 2)
            half = -(-half // align) * align   # round up to alignment
            if half < S:
                return half
        return S                               # full-extent block
    ts = (max_rows // align) * align
    if ts < align:
        ts = align if S >= align else S
    return ts


def positional_encoding(x, *, tile_s=None):
    """x: (S, B, D) float array. Returns x + pe[:S] (dropout p=0.0 => identity)."""
    S, B, D = x.shape
    assert D % 2 == 0, "d_model must be even (sin/cos interleave)"

    BD = B * D
    itemsize = jnp.dtype(x.dtype).itemsize
    row_bytes = BD * itemsize
    ts = _pick_tile(S, row_bytes, itemsize) if tile_s is None else tile_s
    grid_len = pl.cdiv(S, ts)

    # Precompute the d-only factors once (leaves the kernel entirely), then
    # tile across the batch axis so they match the flattened (S, B*D) layout.
    d_idx = jnp.arange(D, dtype=jnp.int32)
    k = (d_idx - (d_idx % 2)).astype(jnp.float32)               # 2k for even/odd pairs
    inv_freq = jnp.exp(k * (-math.log(10000.0) / D))[None, :]   # (1, D)
    phase = ((d_idx % 2).astype(jnp.float32) * (math.pi / 2.0))[None, :]  # (1, D)
    inv_freq_bd = jnp.tile(inv_freq, (1, B))                    # (1, B*D)
    phase_bd = jnp.tile(phase, (1, B))                          # (1, B*D)

    # Lane-dense 2D view: free row-major reshape, batch-major / d-minor.
    x2d = x.reshape(S, BD)

    out2d = pl.pallas_call(
        _pe_add_kernel,
        out_shape=jax.ShapeDtypeStruct((S, BD), x.dtype),
        grid_spec=pltpu.PrefetchScalarGridSpec(
            num_scalar_prefetch=0,
            grid=(grid_len,),
            in_specs=[
                pl.BlockSpec((1, BD), lambda i: (0, 0)),   # inv_freq, VMEM-resident
                pl.BlockSpec((1, BD), lambda i: (0, 0)),   # phase, VMEM-resident
                pl.BlockSpec((ts, BD), lambda i: (i, 0)),
            ],
            out_specs=pl.BlockSpec((ts, BD), lambda i: (i, 0)),
        ),
        compiler_params=pltpu.CompilerParams(
            dimension_semantics=("parallel",),
            vmem_limit_bytes=48 << 20,  # 4x ~8 MiB double-buffered blocks fit all gens
        ),
    )(inv_freq_bd, phase_bd, x2d)

    return out2d.reshape(S, B, D)


def _reference(x):
    """Pure-JAX reference mirroring the PyTorch module exactly."""
    S, B, D = x.shape
    position = jnp.arange(S, dtype=jnp.float32)[:, None]          # (S, 1)
    div_term = jnp.exp(
        jnp.arange(0, D, 2, dtype=jnp.float32) * (-math.log(10000.0) / D)
    )                                                              # (D/2,)
    pe = jnp.zeros((S, D), jnp.float32)
    pe = pe.at[:, 0::2].set(jnp.sin(position * div_term))
    pe = pe.at[:, 1::2].set(jnp.cos(position * div_term))
    pe = pe[:, None, :]                                            # (S, 1, D)
    return x + pe


if __name__ == "__main__":
    key = jax.random.PRNGKey(0)
    S, B, D = 8, 2, 32  # small shapes: seq=8, batch=2, d_model=32
    x = jax.random.normal(key, (S, B, D), dtype=jnp.float32)

    ref = _reference(x)

    out = positional_encoding(x)
    out = jax.block_until_ready(out)

    assert out.shape == (S, B, D)
    assert jnp.allclose(out, ref, atol=1e-5, rtol=1e-5), "mismatch vs reference"

    print("KERNEL_OK")
</pallas_src>

<mosaic_0001>
module attributes {stable_mosaic.version = 11 : i64} {
  func.func @_pe_add_kernel(%arg0: i32, %arg1: memref<1x64xf32, #tpu.memory_space<vmem>>, %arg2: memref<1x64xf32, #tpu.memory_space<vmem>>, %arg3: memref<8x64xf32, #tpu.memory_space<vmem>>, %arg4: memref<8x64xf32, #tpu.memory_space<vmem>>) attributes {dimension_semantics = [#tpu.dimension_semantics<parallel>], iteration_bounds = array<i64: 1>, scalar_prefetch = 0 : i64, scratch_operands = 0 : i64, tpu.core_type = #tpu.core_type<tc>, window_params = [{pipeline_mode = #tpu.pipeline_mode<synchronous>, transform_indices = @transform_0, window_bounds = array<i64: 1, 64>}, {pipeline_mode = #tpu.pipeline_mode<synchronous>, transform_indices = @transform_1, window_bounds = array<i64: 1, 64>}, {transform_indices = @transform_2, window_bounds = array<i64: 8, 64>}, {transform_indices = @transform_3, window_bounds = array<i64: 8, 64>}]} {
    %c8_i32 = arith.constant 8 : i32
    %0 = arith.muli %arg0, %c8_i32 : i32
    %1 = tpu.iota {dimensions = array<i32: 0>} : vector<8x1xi32>
    %2 = vector.broadcast %0 : i32 to vector<8x1xi32>
    %3 = arith.addi %2, %1 : vector<8x1xi32>
    %4 = arith.sitofp %3 : vector<8x1xi32> to vector<8x1xf32>
    %c0 = arith.constant 0 : index
    %c0_0 = arith.constant 0 : index
    %5 = vector.load %arg1[%c0, %c0_0] : memref<1x64xf32, #tpu.memory_space<vmem>>, vector<1x64xf32>
    %6 = vector.broadcast %4 : vector<8x1xf32> to vector<8x64xf32>
    %7 = vector.broadcast %5 : vector<1x64xf32> to vector<8x64xf32>
    %8 = arith.mulf %6, %7 : vector<8x64xf32>
    %c0_1 = arith.constant 0 : index
    %c0_2 = arith.constant 0 : index
    %9 = vector.load %arg2[%c0_1, %c0_2] : memref<1x64xf32, #tpu.memory_space<vmem>>, vector<1x64xf32>
    %10 = vector.broadcast %9 : vector<1x64xf32> to vector<8x64xf32>
    %11 = arith.addf %8, %10 : vector<8x64xf32>
    %12 = math.sin %11 : vector<8x64xf32>
    %c0_3 = arith.constant 0 : index
    %c0_4 = arith.constant 0 : index
    %13 = vector.load %arg3[%c0_3, %c0_4] : memref<8x64xf32, #tpu.memory_space<vmem>>, vector<8x64xf32>
    %14 = arith.addf %13, %12 : vector<8x64xf32>
    %c0_5 = arith.constant 0 : index
    %c0_6 = arith.constant 0 : index
    %15 = vector.load %arg4[%c0_5, %c0_6] : memref<8x64xf32, #tpu.memory_space<vmem>>, vector<8x64xf32>
    tpu.vector_store %arg4[%c0_5, %c0_6], %14 {strides = array<i32>} : memref<8x64xf32, #tpu.memory_space<vmem>>, vector<8x64xf32>,
    return
  }
  func.func @transform_0(%arg0: i32) -> (i32, i32) {
    %c0_i32 = arith.constant 0 : i32
    %c0_i32_0 = arith.constant 0 : i32
    %c0_i32_1 = arith.constant 0 : i32
    return %c0_i32, %c0_i32_0 : i32, i32
  }
  func.func @transform_1(%arg0: i32) -> (i32, i32) {
    %c0_i32 = arith.constant 0 : i32
    %c0_i32_0 = arith.constant 0 : i32
    %c0_i32_1 = arith.constant 0 : i32
    return %c0_i32, %c0_i32_0 : i32, i32
  }
  func.func @transform_2(%arg0: i32) -> (i32, i32) {
    %c0_i32 = arith.constant 0 : i32
    %c0_i32_0 = arith.constant 0 : i32
    return %arg0, %c0_i32 : i32, i32
  }
  func.func @transform_3(%arg0: i32) -> (i32, i32) {
    %c0_i32 = arith.constant 0 : i32
    %c0_i32_0 = arith.constant 0 : i32
    return %arg0, %c0_i32 : i32, i32
  }
}

</mosaic_0001>

<llo_original>
// kernel: tpu_custom_call.1
$region0: #{tpu_custom_call.1}
  #allocation0 [shape = 'u32[]', space=smem, size = 0x4, offset = 0x4, fixed_abs, tag = 'smem constant byte address 0x4 - core index']
  #allocation1 [shape = 'u32[144,128]{1,0:T(1,128)}', space=vmem, size = 0x12000, scoped, tag = 'internal scratch']
  %s0 = inlined_call_operand.hbm [shape: f32[1,64], index: 0, kind: input, shape index: {}]
  %s1 = inlined_call_operand.vmem [shape: f32[1,64], index: 1, kind: input, shape index: {}]
  %s2 = inlined_call_operand.hbm [shape: f32[8,64], index: 2, kind: input, shape index: {}]
  %s3 = inlined_call_operand.hbm [shape: f32[8,64], index: 3, kind: output, shape index: {}]
  %s4 = sld [smem:[#allocation0]]
  $region30: #{tpu_custom_call.1} parent=0
    _
  %s6 = ssub.s32 1, %s4
  %s7 = scalar_select 0, %s6, %s4
  $region1: #{tpu_custom_call.1} parent=0
    #allocation2 [shape = 'u8[512]{0}', space=vmem, size = 0x400, scoped, tag = 'input window, operand 0, single buffered']
    #allocation3 [shape = 's32[1]{0}', space=sflag, size = 0x4, scoped, tag = 'scoped memory for tpu_custom_call.1']
    #allocation4 [shape = 's32[1]{0}', space=sflag, size = 0x4, scoped, tag = 'scoped memory for tpu_custom_call.1']
    #allocation5 [shape = 'u8[4096]{0}', space=vmem, size = 0x1000, scoped, tag = 'input window, operand 2, single buffered']
    #allocation6 [shape = 's32[1]{0}', space=sflag, size = 0x4, scoped, tag = 'scoped memory for tpu_custom_call.1']
    #allocation7 [shape = 'u8[4096]{0}', space=vmem, size = 0x1000, scoped, tag = 'output window, operand 0, single buffered']
    %8 = vsyncpa [#allocation3], 0
    %9 = vsyncpa [#allocation6], 0
    %10 = vsyncpa [#allocation4], 0
    // Predicated region
    $region2: #{tpu_custom_call.1} parent=1 // pred_check
      _
    $region3: #{tpu_custom_call.1} parent=1 // pred_check_branch
      %12 = sbr.rel (0) target = $region5
    $region4: #{tpu_custom_call.1} parent=1 // pred_region
      %s14 = ssub.s32 16, 16
      %15 = vsyncadd [#allocation3], %s14
      %s17 = sshll.u32 [#allocation2], 4
      %s18 = int_to_ptr.vmem [resolvable:$true] %s17
      %20 = dma.hbm_to_vmem [thread:$0]  %s0, 16, %s18, [#allocation3]
    $region5: #{tpu_custom_call.1} parent=1 // pred_fallthru
      _
    // Predicated region
    $region6: #{tpu_custom_call.1} parent=1 // pred_check
      _
    $region7: #{tpu_custom_call.1} parent=1 // pred_check_branch
      %22 = sbr.rel (0) target = $region9
    $region8: #{tpu_custom_call.1} parent=1 // pred_region
      _
    $region9: #{tpu_custom_call.1} parent=1 // pred_fallthru
      _
    // Predicated region
    $region10: #{tpu_custom_call.1} parent=1 // pred_check
      _
    $region11: #{tpu_custom_call.1} parent=1 // pred_check_branch
      %24 = sbr.rel (0) target = $region13
    $region12: #{tpu_custom_call.1} parent=1 // pred_region
      %s26 = ssub.s32 128, 128
      %27 = vsyncadd [#allocation6], %s26
      %s29 = sshll.u32 [#allocation5], 4
      %s30 = int_to_ptr.vmem [resolvable:$true] %s29
      %32 = dma.hbm_to_vmem [thread:$0]  %s2, 128, %s30, [#allocation6]
    $region13: #{tpu_custom_call.1} parent=1 // pred_fallthru
      _
    // Predicated region
    $region14: #{tpu_custom_call.1} parent=1 // pred_check
      _
    $region15: #{tpu_custom_call.1} parent=1 // pred_check_branch
      %34 = sbr.rel (0) target = $region17
    $region16: #{tpu_custom_call.1} parent=1 // pred_region
      %35 = dma.done [#allocation3], 16
    $region17: #{tpu_custom_call.1} parent=1 // pred_fallthru
      _
    // Predicated region
    $region18: #{tpu_custom_call.1} parent=1 // pred_check
      _
    $region19: #{tpu_custom_call.1} parent=1 // pred_check_branch
      %37 = sbr.rel (0) target = $region21
    $region20: #{tpu_custom_call.1} parent=1 // pred_region
      %38 = dma.done [#allocation6], 128
    $region21: #{tpu_custom_call.1} parent=1 // pred_fallthru
      _
    %s39 = smul.u32 0, 8
    %v40 = vlaneseq
    %v41 = vshrl.u32 %v40, 7
    %v42 = vstv %s39
    %v43 = vadd.s32 %v42, %v41
    %v44 = vcvt.s32.f32 %v43
    %v45 = vld [vmem:[#allocation2] sm:$0x1]
    %v47 = vlaneseq
    %v48 = vshrl.u32 %v47, 7
    %v49 = vsub.s32 0, %v48
    %v50 = vrot.slane %v45, %v49
    %v52 = vmul.f32 %v44, %v50
    %v53 = vld [vmem:[%s1] sm:$0x1]
    %v55 = vlaneseq
    %v56 = vshrl.u32 %v55, 7
    %v57 = vsub.s32 0, %v56
    %v58 = vrot.slane %v53, %v57
    %v60 = vadd.f32 %v52, %v58
    %v61 = vand.u32 2147483647, %v60
    %vm62 = vcmp.le.f32.partialorder %v61, 0.7853982
    %vm63 = vcmp.lt.s32.totalorder %v60, 0
    %v64 = vand.u32 %v60, 2139095040
    %v65 = vshrl.u32 %v64, 23
    %v66 = vsub.s32 %v65, 127
    %v67 = vand.u32 2147483647, %v60
    %v68 = vand.u32 %v67, 8388607
    %v69 = vor.u32 %v68, 8388608
    %v70 = vsub.s32 0, %v69
    %v71 = vadd.s32 %v66, 1
    %vm72 = vcmp.gt.s32.totalorder %v71, 0
    %v73 = vsel %vm72, %v71, 0
    %v74 = vshrl.u32 %v73, 5
    %v75 = vand.u32 %v73, 31
    %v76 = vsub.s32 32, %v75
    %v77 = vshrl.u32 683565275, %v76
    %v78 = vshll.u32 683565275, %v75
    %v79 = vshrl.u32 2475754826, %v76
    %v80 = vor.u32 %v78, %v79
    %v81 = vshll.u32 2475754826, %v75
    %v82 = vshrl.u32 2131351028, %v76
    %v83 = vor.u32 %v81, %v82
    %v84 = vshll.u32 2131351028, %v75
    %v85 = vshrl.u32 2102212464, %v76
    %v86 = vor.u32 %v84, %v85
    %v87 = vshll.u32 2102212464, %v75
    %v88 = vshrl.u32 920167782, %v76
    %v89 = vor.u32 %v87, %v88
    %v90 = vshll.u32 920167782, %v75
    %v91 = vshrl.u32 1326507024, %v76
    %v92 = vor.u32 %v90, %v91
    %vm93 = vcmp.lt.s32.totalorder %v74, 1
    %vm94 = vcmp.lt.s32.totalorder %v74, 2
    %vm95 = vcmp.lt.s32.totalorder %v74, 3
    %vm96 = vcmp.lt.s32.totalorder %v74, 4
    %v97 = vsel %vm93, %v77, %v80
    %v98 = vsel %vm96, %v86, 2102212464
    %v99 = vsel %vm95, %v83, %v98
    %v100 = vsel %vm94, %v97, %v99
    %v101 = vsel %vm93, %v80, %v83
    %v102 = vsel %vm96, %v89, 920167782
    %v103 = vsel %vm95, %v86, %v102
    %v104 = vsel %vm94, %v101, %v103
    %v105 = vsel %vm93, %v83, %v86
    %v106 = vsel %vm96, %v92, 1326507024
    %v107 = vsel %vm95, %v89, %v106
    %v108 = vsel %vm94, %v105, %v107
    %v109 = vshll.u32 %v69, 8
    %v110 = vmul.u32.u64.compose %v109, %v108
    %v111 = vextract.low.u32 %v110
    %v112 = vextract.high.u32 %v110
    %v113 = vmul.u32.u64.compose %v109, %v104
    %v114 = vextract.low.u32 %v113
    %v115 = vextract.high.u32 %v113
    %v116 = vmul.u32 %v109, %v100
    %v117 = vadd.s32 %v112, %v114
    %vm118 = vc.u32 %v112, %v114
    %v119 = vadd.s32 %v115, 1
    %v120 = vsel %vm118, %v119, %v115
    %v121 = vadd.s32 %v116, %v120
    %v122 = vadd.s32 %v121, 536870912
    %v123 = vshrl.u32 %v122, 30
    %v124 = vshll.u32 %v123, 30
    %v125 = vsub.s32 %v121, %v124
    %vm126 = vcmp.lt.s32.totalorder %v125, 0
    %v127 = vsub.s32 0, %v125
    %v128 = vsel %vm126, %v127, %v125
    %v129 = vclz %v128
    %v130 = vsub.s32 %v129, 2
    %vm131 = vcmp.gt.s32.totalorder 0, %v130
    %v132 = vsel %vm131, 0, %v130
    %v133 = vsub.s32 32, %v132
    %v134 = vshll.u32 %v125, %v132
    %v135 = vshrl.u32 %v117, %v133
    %v136 = vor.u32 %v134, %v135
    %v137 = vsub.s32 4294967266, %v132
    %v138 = vadd.s32 %v137, 127
    %v139 = vshll.u32 %v138, 23
    %v140 = vor.u32 4788187, %v139
    %v141 = vand.u32 2147483647, %v140
    %v143 = vcvt.s32.f32 %v136
    %v144 = vmul.f32 %v143, %v141
    %v145 = vxor.u32 %v144, 2147483648
    %v146 = vsel %vm63, %v145, %v144
    %v147 = vsub.s32 4, %v123
    %v148 = vsel %vm63, %v147, %v123
    %v149 = vsel %vm62, %v60, %v146
    %v150 = vsel %vm62, 0, %v148
    %v151 = vcosq.f32.pop %v149
    %v152 = vsinq.f32.pop %v149
    %vm153 = vweird.f32 %v60
    %v154 = vadd.s32 %v150, 3
    %v155 = vand.u32 %v154, 3
    %vm156 = vcmp.lt.s32.totalorder %v155, 2
    %vm157 = vcmp.eq.s32.totalorder %v155, 0
    %v158 = vxor.u32 %v152, 2147483648
    %v159 = vsel %vm157, %v151, %v158
    %vm160 = vcmp.eq.s32.totalorder %v155, 2
    %v161 = vxor.u32 %v151, 2147483648
    %v162 = vsel %vm160, %v161, %v152
    %v163 = vsel %vm156, %v159, %v162
    %v164 = vsel %vm153, nan, %v163
    %v165 = vld [vmem:[#allocation5] sm:$0xff]
    %v166 = vadd.f32 %v165, %v164
    %vm167 = vcmask 523264
    %168 = vst.msk [vmem:[#allocation7] sm:$0xff] %vm167, %v166
    // Predicated region
    $region22: #{tpu_custom_call.1} parent=1 // pred_check
      _
    $region23: #{tpu_custom_call.1} parent=1 // pred_check_branch
      %170 = sbr.rel (0) target = $region25
    $region24: #{tpu_custom_call.1} parent=1 // pred_region
      %s172 = ssub.s32 128, 128
      %173 = vsyncadd [#allocation4], %s172
      %s175 = sshll.u32 [#allocation7], 4
      %s176 = int_to_ptr.vmem [resolvable:$true] %s175
      %178 = dma.vmem_to_hbm [thread:$0]  %s176, 128, %s3, [#allocation4]
    $region25: #{tpu_custom_call.1} parent=1 // pred_fallthru
      _
    // Predicated region
    $region26: #{tpu_custom_call.1} parent=1 // pred_check
      _
    $region27: #{tpu_custom_call.1} parent=1 // pred_check_branch
      %180 = sbr.rel (0) target = $region29
    $region28: #{tpu_custom_call.1} parent=1 // pred_region
      %181 = dma.done [#allocation4], 128
    $region29: #{tpu_custom_call.1} parent=1 // pred_fallthru
      _
    %182 = vsyncpa [#allocation3], 1
    %183 = vsyncpa [#allocation6], 1
    %184 = vsyncpa [#allocation4], 1

</llo_original>
